<compile_context>
chip_gen: v6e
topology: v6e:2x2x1
jax: 0.10.0
libtpu: 0.0.40
codegen_flags: <defaults>
</compile_context>

<pallas_src>
import jax
import jax.numpy as jnp
from jax.experimental import pallas as pl
from jax.experimental.pallas import tpu as pltpu

HIDDEN = 256
LANE = 128


def _round_up(x, m):
    return ((x + m - 1) // m) * m


def _cdiv(a, b):
    return (a + b - 1) // b


def _actor_kernel(ma_ref, state_ref, w1_ref, b1_ref, w2_ref, b2_ref,
                  w3_ref, b3_ref, out_ref):
    """One TM-row batch tile through all three layers (everything VMEM-resident).

    Weights arrive as bf16 (MXU-native); activations are cast to bf16 right
    before each dot; accumulation / bias add / ReLU / tanh stay in f32.
    """
    max_action = ma_ref[0]

    # Layer 1: (TM, S) @ (S, 256) + b1, ReLU   (bf16 MXU operands, f32 accumulate)
    x = state_ref[...].astype(jnp.bfloat16)
    h1 = jnp.dot(x, w1_ref[...], preferred_element_type=jnp.float32) + b1_ref[...]
    h1 = jnp.maximum(h1, 0.0)

    # Layer 2: (TM, 256) @ (256, 256) + b2, ReLU
    h2 = jnp.dot(h1.astype(jnp.bfloat16), w2_ref[...],
                 preferred_element_type=jnp.float32) + b2_ref[...]
    h2 = jnp.maximum(h2, 0.0)

    # Layer 3: (TM, 256) @ (256, A_pad) + b3, then max_action * tanh (EUP, f32)
    logits = jnp.dot(h2.astype(jnp.bfloat16), w3_ref[...],
                     preferred_element_type=jnp.float32) + b3_ref[...]
    out_ref[...] = (max_action * jnp.tanh(logits)).astype(out_ref.dtype)


def actor_forward(state, prepped, max_action, *, tm=1024):
    """state: (B, state_dim) f32.  prepped: output of prepare_actor_params()."""
    B, state_dim = state.shape
    action_dim = prepped["action_dim"]
    A_pad = prepped["w3"].shape[1]

    # --- Batch tiling ---------------------------------------------------------
    #  * For B >= 16, cap the tile so the grid has >= 2 steps (v7x megacore
    #    sharding of the "parallel" axis; no-op on single-TC v5e/v6e).
    #  * Derive TM from the tile COUNT so at most 7 rows of padding are wasted
    #    per tile (old rule wasted up to TM-1 rows on awkward batch sizes).
    tm_eff = max(8, int(tm))
    if B >= 16:
        tm_eff = min(tm_eff, _round_up(_cdiv(B, 2), 8))
    num_tiles = max(1, _cdiv(B, tm_eff))
    TM = _round_up(_cdiv(B, num_tiles), 8)
    B_pad = num_tiles * TM
    if B_pad != B:
        state = jnp.pad(state, ((0, B_pad - B), (0, 0)))

    # max_action as an SMEM scalar (no recompile per value; traced values OK).
    ma = jnp.asarray(max_action, jnp.float32).reshape((1,))

    tile = lambda r, c: pl.BlockSpec((r, c), lambda i: (i, 0))       # batch-tiled
    resident = lambda r, c: pl.BlockSpec((r, c), lambda i: (0, 0))   # VMEM-resident

    cost = pl.CostEstimate(
        flops=2 * B_pad * (state_dim * HIDDEN + HIDDEN * HIDDEN + HIDDEN * A_pad),
        transcendentals=B_pad * A_pad,
        bytes_accessed=(4 * B_pad * (state_dim + A_pad)                    # state in, out
                        + 2 * (state_dim * HIDDEN + HIDDEN * HIDDEN        # bf16 weights
                               + HIDDEN * A_pad)
                        + 4 * (2 * HIDDEN + A_pad + 1)),                   # f32 biases + scalar
    )

    out = pl.pallas_call(
        _actor_kernel,
        out_shape=jax.ShapeDtypeStruct((B_pad, A_pad), jnp.float32),
        grid=(num_tiles,),
        in_specs=[
            pl.BlockSpec(memory_space=pltpu.MemorySpace.SMEM),    # max_action
            tile(TM, state_dim),                                  # state (tiled)
            resident(state_dim, HIDDEN), resident(1, HIDDEN),     # w1 (bf16), b1 (f32)
            resident(HIDDEN, HIDDEN),    resident(1, HIDDEN),     # w2 (bf16), b2 (f32)
            resident(HIDDEN, A_pad),     resident(1, A_pad),      # w3 (bf16, padded), b3
        ],
        out_specs=tile(TM, A_pad),
        compiler_params=pltpu.CompilerParams(
            dimension_semantics=("parallel",)),
        cost_estimate=cost,
    )(ma, state, prepped["w1"], prepped["b1"],
      prepped["w2"], prepped["b2"], prepped["w3"], prepped["b3"])

    return out[:B, :action_dim]


def init_actor_params(key, state_dim, action_dim):
    """Deterministic init mimicking PyTorch nn.Linear default (U[-1/sqrt(fan_in), +])."""
    ks = jax.random.split(key, 6)

    def linear(kw, kb, fan_in, fan_out):
        bound = 1.0 / jnp.sqrt(fan_in)
        w = jax.random.uniform(kw, (fan_in, fan_out), jnp.float32, -bound, bound)
        b = jax.random.uniform(kb, (1, fan_out), jnp.float32, -bound, bound)
        return w, b

    w1, b1 = linear(ks[0], ks[1], state_dim, HIDDEN)
    w2, b2 = linear(ks[2], ks[3], HIDDEN, HIDDEN)
    w3, b3 = linear(ks[4], ks[5], HIDDEN, action_dim)
    return {"w1": w1, "b1": b1, "w2": w2, "b2": b2, "w3": w3, "b3": b3}


def prepare_actor_params(params):
    """One-time kernel-format prep: pad layer-3 to a lane-dense 128-wide slab
    and cast weights to bf16 (MXU operands). Biases stay f32."""
    action_dim = params["w3"].shape[1]
    A_pad = _round_up(action_dim, LANE)
    pad = A_pad - action_dim
    return {
        "w1": params["w1"].astype(jnp.bfloat16),
        "b1": params["b1"].astype(jnp.float32),
        "w2": params["w2"].astype(jnp.bfloat16),
        "b2": params["b2"].astype(jnp.float32),
        "w3": jnp.pad(params["w3"], ((0, 0), (0, pad))).astype(jnp.bfloat16),
        "b3": jnp.pad(params["b3"], ((0, 0), (0, pad))).astype(jnp.float32),
        "action_dim": action_dim,
    }


def actor_reference(state, params, max_action):
    """Pure-JAX f32 reference for validation."""
    a = jnp.maximum(state @ params["w1"] + params["b1"], 0.0)
    a = jnp.maximum(a @ params["w2"] + params["b2"], 0.0)
    return max_action * jnp.tanh(a @ params["w3"] + params["b3"])


if __name__ == "__main__":
    key = jax.random.PRNGKey(0)
    k_params, k_state1, k_state2 = jax.random.split(key, 3)

    state_dim = 16
    action_dim = 8
    max_action = 2.0
    params = init_actor_params(k_params, state_dim, action_dim)
    prepped = prepare_actor_params(params)        # one-time pad + bf16 cast

    # Small smoke test (single-tile grid, B < 16).
    batch = 8
    state = jax.random.normal(k_state1, (batch, state_dim), jnp.float32)
    out = jax.block_until_ready(actor_forward(state, prepped, max_action))
    ref = actor_reference(state, params, max_action)
    assert out.shape == (batch, action_dim)
    # bf16 MXU operands with f32 accumulate -> loosened tolerance vs f32 reference.
    assert jnp.allclose(out, ref, atol=5e-2, rtol=5e-2), "mismatch vs reference (B=8)"

    # Multi-tile grid + batch-padding path (B not a multiple of the tile) and
    # the >=2-tile rule for B >= 16 (here: 3 tiles of 88 rows, 4 padded rows).
    batch2 = 260
    state2 = jax.random.normal(k_state2, (batch2, state_dim), jnp.float32)
    out2 = jax.block_until_ready(actor_forward(state2, prepped, max_action, tm=128))
    ref2 = actor_reference(state2, params, max_action)
    assert out2.shape == (batch2, action_dim)
    assert jnp.allclose(out2, ref2, atol=5e-2, rtol=5e-2), "mismatch vs reference (B=260)"

    print("KERNEL_OK")
</pallas_src>

<mosaic_0001>
module attributes {stable_mosaic.version = 11 : i64} {
  func.func @_actor_kernel(%arg0: i32, %arg1: memref<1xf32, #tpu.memory_space<smem>>, %arg2: memref<8x16xf32, #tpu.memory_space<vmem>>, %arg3: memref<16x256xbf16, #tpu.memory_space<vmem>>, %arg4: memref<1x256xf32, #tpu.memory_space<vmem>>, %arg5: memref<256x256xbf16, #tpu.memory_space<vmem>>, %arg6: memref<1x256xf32, #tpu.memory_space<vmem>>, %arg7: memref<256x128xbf16, #tpu.memory_space<vmem>>, %arg8: memref<1x128xf32, #tpu.memory_space<vmem>>, %arg9: memref<8x128xf32, #tpu.memory_space<vmem>>) attributes {dimension_semantics = [#tpu.dimension_semantics<parallel>], iteration_bounds = array<i64: 1>, scalar_prefetch = 0 : i64, scratch_operands = 0 : i64, tpu.core_type = #tpu.core_type<tc>, window_params = [{transform_indices = @transform_0, window_bounds = array<i64: 1>}, {transform_indices = @transform_1, window_bounds = array<i64: 8, 16>}, {pipeline_mode = #tpu.pipeline_mode<synchronous>, transform_indices = @transform_2, window_bounds = array<i64: 16, 256>}, {pipeline_mode = #tpu.pipeline_mode<synchronous>, transform_indices = @transform_3, window_bounds = array<i64: 1, 256>}, {pipeline_mode = #tpu.pipeline_mode<synchronous>, transform_indices = @transform_4, window_bounds = array<i64: 256, 256>}, {pipeline_mode = #tpu.pipeline_mode<synchronous>, transform_indices = @transform_5, window_bounds = array<i64: 1, 256>}, {pipeline_mode = #tpu.pipeline_mode<synchronous>, transform_indices = @transform_6, window_bounds = array<i64: 256, 128>}, {pipeline_mode = #tpu.pipeline_mode<synchronous>, transform_indices = @transform_7, window_bounds = array<i64: 1, 128>}, {transform_indices = @transform_8, window_bounds = array<i64: 8, 128>}]} {
    %c0 = arith.constant 0 : index
    %0 = memref.load %arg1[%c0] : memref<1xf32, #tpu.memory_space<smem>>
    %c0_0 = arith.constant 0 : index
    %c0_1 = arith.constant 0 : index
    %1 = vector.load %arg2[%c0_0, %c0_1] : memref<8x16xf32, #tpu.memory_space<vmem>>, vector<8x16xf32>
    %2 = arith.truncf %1 : vector<8x16xf32> to vector<8x16xbf16>
    %c0_2 = arith.constant 0 : index
    %c0_3 = arith.constant 0 : index
    %3 = vector.load %arg3[%c0_2, %c0_3] : memref<16x256xbf16, #tpu.memory_space<vmem>>, vector<16x256xbf16>
    %cst = arith.constant dense<0.000000e+00> : vector<8x256xf32>
    %4 = tpu.matmul %2, %3, %cst {dimension_numbers = #tpu.dot_dimension_numbers<[1], [0], [0], [1], [0, 0, 1, 1], [], []>} : vector<8x16xbf16>, vector<16x256xbf16>, vector<8x256xf32> -> vector<8x256xf32>
    %c0_4 = arith.constant 0 : index
    %c0_5 = arith.constant 0 : index
    %5 = vector.load %arg4[%c0_4, %c0_5] : memref<1x256xf32, #tpu.memory_space<vmem>>, vector<1x256xf32>
    %6 = vector.broadcast %5 : vector<1x256xf32> to vector<8x256xf32>
    %7 = arith.addf %4, %6 : vector<8x256xf32>
    %cst_6 = arith.constant 0.000000e+00 : f32
    %8 = vector.broadcast %cst_6 : f32 to vector<8x256xf32>
    %9 = arith.maximumf %7, %8 : vector<8x256xf32>
    %10 = arith.truncf %9 : vector<8x256xf32> to vector<8x256xbf16>
    %c0_7 = arith.constant 0 : index
    %c0_8 = arith.constant 0 : index
    %11 = vector.load %arg5[%c0_7, %c0_8] : memref<256x256xbf16, #tpu.memory_space<vmem>>, vector<256x256xbf16>
    %cst_9 = arith.constant dense<0.000000e+00> : vector<8x256xf32>
    %12 = tpu.matmul %10, %11, %cst_9 {dimension_numbers = #tpu.dot_dimension_numbers<[1], [0], [0], [1], [0, 0, 1, 1], [], []>} : vector<8x256xbf16>, vector<256x256xbf16>, vector<8x256xf32> -> vector<8x256xf32>
    %c0_10 = arith.constant 0 : index
    %c0_11 = arith.constant 0 : index
    %13 = vector.load %arg6[%c0_10, %c0_11] : memref<1x256xf32, #tpu.memory_space<vmem>>, vector<1x256xf32>
    %14 = vector.broadcast %13 : vector<1x256xf32> to vector<8x256xf32>
    %15 = arith.addf %12, %14 : vector<8x256xf32>
    %cst_12 = arith.constant 0.000000e+00 : f32
    %16 = vector.broadcast %cst_12 : f32 to vector<8x256xf32>
    %17 = arith.maximumf %15, %16 : vector<8x256xf32>
    %18 = arith.truncf %17 : vector<8x256xf32> to vector<8x256xbf16>
    %c0_13 = arith.constant 0 : index
    %c0_14 = arith.constant 0 : index
    %19 = vector.load %arg7[%c0_13, %c0_14] : memref<256x128xbf16, #tpu.memory_space<vmem>>, vector<256x128xbf16>
    %cst_15 = arith.constant dense<0.000000e+00> : vector<8x128xf32>
    %20 = tpu.matmul %18, %19, %cst_15 {dimension_numbers = #tpu.dot_dimension_numbers<[1], [0], [0], [1], [0, 0, 1, 1], [], []>} : vector<8x256xbf16>, vector<256x128xbf16>, vector<8x128xf32> -> vector<8x128xf32>
    %c0_16 = arith.constant 0 : index
    %c0_17 = arith.constant 0 : index
    %21 = vector.load %arg8[%c0_16, %c0_17] : memref<1x128xf32, #tpu.memory_space<vmem>>, vector<1x128xf32>
    %22 = vector.broadcast %21 : vector<1x128xf32> to vector<8x128xf32>
    %23 = arith.addf %20, %22 : vector<8x128xf32>
    %24 = math.tanh %23 : vector<8x128xf32>
    %25 = vector.broadcast %0 : f32 to vector<8x128xf32>
    %26 = arith.mulf %25, %24 : vector<8x128xf32>
    %c0_18 = arith.constant 0 : index
    %c0_19 = arith.constant 0 : index
    %27 = vector.load %arg9[%c0_18, %c0_19] : memref<8x128xf32, #tpu.memory_space<vmem>>, vector<8x128xf32>
    tpu.vector_store %arg9[%c0_18, %c0_19], %26 {strides = array<i32>} : memref<8x128xf32, #tpu.memory_space<vmem>>, vector<8x128xf32>,
    return
  }
  func.func @transform_0(%arg0: i32) -> i32 {
    %c0_i32 = arith.constant 0 : i32
    %c0_i32_0 = arith.constant 0 : i32
    return %c0_i32 : i32
  }
  func.func @transform_1(%arg0: i32) -> (i32, i32) {
    %c0_i32 = arith.constant 0 : i32
    %c0_i32_0 = arith.constant 0 : i32
    return %arg0, %c0_i32 : i32, i32
  }
  func.func @transform_2(%arg0: i32) -> (i32, i32) {
    %c0_i32 = arith.constant 0 : i32
    %c0_i32_0 = arith.constant 0 : i32
    %c0_i32_1 = arith.constant 0 : i32
    return %c0_i32, %c0_i32_0 : i32, i32
  }
  func.func @transform_3(%arg0: i32) -> (i32, i32) {
    %c0_i32 = arith.constant 0 : i32
    %c0_i32_0 = arith.constant 0 : i32
    %c0_i32_1 = arith.constant 0 : i32
    return %c0_i32, %c0_i32_0 : i32, i32
  }
  func.func @transform_4(%arg0: i32) -> (i32, i32) {
    %c0_i32 = arith.constant 0 : i32
    %c0_i32_0 = arith.constant 0 : i32
    %c0_i32_1 = arith.constant 0 : i32
    return %c0_i32, %c0_i32_0 : i32, i32
  }
  func.func @transform_5(%arg0: i32) -> (i32, i32) {
    %c0_i32 = arith.constant 0 : i32
    %c0_i32_0 = arith.constant 0 : i32
    %c0_i32_1 = arith.constant 0 : i32
    return %c0_i32, %c0_i32_0 : i32, i32
  }
  func.func @transform_6(%arg0: i32) -> (i32, i32) {
    %c0_i32 = arith.constant 0 : i32
    %c0_i32_0 = arith.constant 0 : i32
    %c0_i32_1 = arith.constant 0 : i32
    return %c0_i32, %c0_i32_0 : i32, i32
  }
  func.func @transform_7(%arg0: i32) -> (i32, i32) {
    %c0_i32 = arith.constant 0 : i32
    %c0_i32_0 = arith.constant 0 : i32
    %c0_i32_1 = arith.constant 0 : i32
    return %c0_i32, %c0_i32_0 : i32, i32
  }
  func.func @transform_8(%arg0: i32) -> (i32, i32) {
    %c0_i32 = arith.constant 0 : i32
    %c0_i32_0 = arith.constant 0 : i32
    return %arg0, %c0_i32 : i32, i32
  }
}

</mosaic_0001>

<llo_original>
// kernel: tpu_custom_call.1
$region0: #{tpu_custom_call.1}
  #allocation0 [shape = 'u32[]', space=smem, size = 0x4, offset = 0x4, fixed_abs, tag = 'smem constant byte address 0x4 - core index']
  #allocation1 [shape = 'u32[144,128]{1,0:T(1,128)}', space=vmem, size = 0x12000, scoped, tag = 'internal scratch']
  #allocation2 [shape = 'f32[1]{0:T(128)S(6)}', space=smem, size = 0x200, scoped, tag = 'scoped memory for tpu_custom_call.1']
  %s0 = inlined_call_operand.<no memory space> [shape: f32[1], index: 0, kind: input, shape index: {}]
  %s1 = inlined_call_operand.hbm [shape: f32[8,16], index: 1, kind: input, shape index: {}]
  %s2 = inlined_call_operand.hbm [shape: bf16[16,256], index: 2, kind: input, shape index: {}]
  %s3 = inlined_call_operand.vmem [shape: f32[1,256], index: 3, kind: input, shape index: {}]
  %s4 = inlined_call_operand.hbm [shape: bf16[256,256], index: 4, kind: input, shape index: {}]
  %s5 = inlined_call_operand.vmem [shape: f32[1,256], index: 5, kind: input, shape index: {}]
  %s6 = inlined_call_operand.hbm [shape: bf16[256,128], index: 6, kind: input, shape index: {}]
  %s7 = inlined_call_operand.vmem [shape: f32[1,128], index: 7, kind: input, shape index: {}]
  %s8 = inlined_call_operand.hbm [shape: f32[8,128], index: 8, kind: output, shape index: {}]
  %s9 = sld [smem:[#allocation0]]
  $region58: #{tpu_custom_call.1} parent=0
    _
  %s11 = ssub.s32 1, %s9
  %s12 = scalar_select 0, %s11, %s9
  %13 = sst [smem:[#allocation2]] %s0
  $region1: #{tpu_custom_call.1} parent=0
    #allocation3 [shape = 'u8[4096]{0}', space=vmem, size = 0x1000, scoped, tag = 'input window, operand 1, single buffered']
    #allocation4 [shape = 's32[1]{0}', space=sflag, size = 0x4, scoped, tag = 'scoped memory for tpu_custom_call.1']
    #allocation5 [shape = 's32[1]{0}', space=sflag, size = 0x4, scoped, tag = 'scoped memory for tpu_custom_call.1']
    #allocation6 [shape = 'u8[8192]{0}', space=vmem, size = 0x2000, scoped, tag = 'input window, operand 2, single buffered']
    #allocation7 [shape = 's32[1]{0}', space=sflag, size = 0x4, scoped, tag = 'scoped memory for tpu_custom_call.1']
    #allocation8 [shape = 'u8[131072]{0}', space=vmem, size = 0x20000, scoped, tag = 'input window, operand 4, single buffered']
    #allocation9 [shape = 'u8[65536]{0}', space=vmem, size = 0x10000, scoped, tag = 'input window, operand 6, single buffered']
    #allocation10 [shape = 's32[1]{0}', space=sflag, size = 0x4, scoped, tag = 'scoped memory for tpu_custom_call.1']
    #allocation11 [shape = 'u8[4096]{0}', space=vmem, size = 0x1000, scoped, tag = 'output window, operand 0, single buffered']
    %14 = vsyncpa [#allocation4], 0
    %15 = vsyncpa [#allocation7], 0
    %16 = vsyncpa [#allocation10], 0
    %17 = vsyncpa [#allocation5], 0
    // Predicated region
    $region2: #{tpu_custom_call.1} parent=1 // pred_check
      _
    $region3: #{tpu_custom_call.1} parent=1 // pred_check_branch
      %19 = sbr.rel (0) target = $region5
    $region4: #{tpu_custom_call.1} parent=1 // pred_region
      _
    $region5: #{tpu_custom_call.1} parent=1 // pred_fallthru
      _
    // Predicated region
    $region6: #{tpu_custom_call.1} parent=1 // pred_check
      _
    $region7: #{tpu_custom_call.1} parent=1 // pred_check_branch
      %21 = sbr.rel (0) target = $region9
    $region8: #{tpu_custom_call.1} parent=1 // pred_region
      %s23 = ssub.s32 128, 128
      %24 = vsyncadd [#allocation4], %s23
      %s26 = sshll.u32 [#allocation3], 4
      %s27 = int_to_ptr.vmem [resolvable:$true] %s26
      %29 = dma.hbm_to_vmem [thread:$0]  %s1, 128, %s27, [#allocation4]
    $region9: #{tpu_custom_call.1} parent=1 // pred_fallthru
      _
    // Predicated region
    $region10: #{tpu_custom_call.1} parent=1 // pred_check
      _
    $region11: #{tpu_custom_call.1} parent=1 // pred_check_branch
      %31 = sbr.rel (0) target = $region13
    $region12: #{tpu_custom_call.1} parent=1 // pred_region
      %s33 = ssub.s32 256, 256
      %34 = vsyncadd [#allocation7], %s33
      %s35 = sshll.u32 [#allocation6], 4
      %s36 = int_to_ptr.vmem [resolvable:$true] %s35
      %41 = dma.hbm_to_vmem [thread:$0]  %s2, 256, %s36, [#allocation7], 128, 128, 8
    $region13: #{tpu_custom_call.1} parent=1 // pred_fallthru
      _
    // Predicated region
    $region14: #{tpu_custom_call.1} parent=1 // pred_check
      _
    $region15: #{tpu_custom_call.1} parent=1 // pred_check_branch
      %43 = sbr.rel (0) target = $region17
    $region16: #{tpu_custom_call.1} parent=1 // pred_region
      _
    $region17: #{tpu_custom_call.1} parent=1 // pred_fallthru
      _
    // Predicated region
    $region18: #{tpu_custom_call.1} parent=1 // pred_check
      _
    $region19: #{tpu_custom_call.1} parent=1 // pred_check_branch
      %45 = sbr.rel (0) target = $region21
    $region20: #{tpu_custom_call.1} parent=1 // pred_region
      %s47 = ssub.s32 4096, 4096
      %48 = vsyncadd [#allocation7], %s47
      %s49 = sshll.u32 [#allocation8], 4
      %s50 = int_to_ptr.vmem [resolvable:$true] %s49
      %55 = dma.hbm_to_vmem [thread:$0]  %s4, 4096, %s50, [#allocation7], 128, 128, 8
    $region21: #{tpu_custom_call.1} parent=1 // pred_fallthru
      _
    // Predicated region
    $region22: #{tpu_custom_call.1} parent=1 // pred_check
      _
    $region23: #{tpu_custom_call.1} parent=1 // pred_check_branch
      %57 = sbr.rel (0) target = $region25
    $region24: #{tpu_custom_call.1} parent=1 // pred_region
      _
    $region25: #{tpu_custom_call.1} parent=1 // pred_fallthru
      _
    // Predicated region
    $region26: #{tpu_custom_call.1} parent=1 // pred_check
      _
    $region27: #{tpu_custom_call.1} parent=1 // pred_check_branch
      %59 = sbr.rel (0) target = $region29
    $region28: #{tpu_custom_call.1} parent=1 // pred_region
      %s61 = ssub.s32 2048, 2048
      %62 = vsyncadd [#allocation10], %s61
      %s63 = sshll.u32 [#allocation9], 4
      %s64 = int_to_ptr.vmem [resolvable:$true] %s63
      %69 = dma.hbm_to_vmem [thread:$0]  %s6, 2048, %s64, [#allocation10], 64, 64, 4
    $region29: #{tpu_custom_call.1} parent=1 // pred_fallthru
      _
    // Predicated region
    $region30: #{tpu_custom_call.1} parent=1 // pred_check
      _
    $region31: #{tpu_custom_call.1} parent=1 // pred_check_branch
      %71 = sbr.rel (0) target = $region33
    $region32: #{tpu_custom_call.1} parent=1 // pred_region
      _
    $region33: #{tpu_custom_call.1} parent=1 // pred_fallthru
      _
    // Predicated region
    $region34: #{tpu_custom_call.1} parent=1 // pred_check
      _
    $region35: #{tpu_custom_call.1} parent=1 // pred_check_branch
      %73 = sbr.rel (0) target = $region37
    $region36: #{tpu_custom_call.1} parent=1 // pred_region
      %74 = dma.done [#allocation4], 128
    $region37: #{tpu_custom_call.1} parent=1 // pred_fallthru
      _
    // Predicated region
    $region38: #{tpu_custom_call.1} parent=1 // pred_check
      _
    $region39: #{tpu_custom_call.1} parent=1 // pred_check_branch
      %76 = sbr.rel (0) target = $region41
    $region40: #{tpu_custom_call.1} parent=1 // pred_region
      %77 = dma.done [#allocation7], 256
    $region41: #{tpu_custom_call.1} parent=1 // pred_fallthru
      _
    // Predicated region
    $region42: #{tpu_custom_call.1} parent=1 // pred_check
      _
    $region43: #{tpu_custom_call.1} parent=1 // pred_check_branch
      %79 = sbr.rel (0) target = $region45
    $region44: #{tpu_custom_call.1} parent=1 // pred_region
      %80 = dma.done [#allocation7], 4096
    $region45: #{tpu_custom_call.1} parent=1 // pred_fallthru
      _
    // Predicated region
    $region46: #{tpu_custom_call.1} parent=1 // pred_check
      _
    $region47: #{tpu_custom_call.1} parent=1 // pred_check_branch
      %82 = sbr.rel (0) target = $region49
    $region48: #{tpu_custom_call.1} parent=1 // pred_region
      %83 = dma.done [#allocation10], 2048
    $region49: #{tpu_custom_call.1} parent=1 // pred_fallthru
      _
    %s85 = sld [smem:[#allocation2]]
    %v86 = vld [vmem:[#allocation3] sm:$0xff]
    %v87 = vpack.c.bf16 %v86, %v86
    %v88 = vld [vmem:[#allocation6] sm:$0xff]
    %v89 = vld [vmem:[#allocation6 + $0x8] sm:$0xff]
    %v90 = vld [vmem:[%s3] sm:$0x3]
    %v92 = vlaneseq
    %v93 = vshrl.u32 %v92, 7
    %v94 = vsub.s32 0, %v93
    %v95 = vrot.slane %v90, %v94
    %v96 = vlaneseq
    %v97 = vshrl.u32 %v96, 7
    %v98 = vsub.s32 1, %v97
    %v99 = vrot.slane %v90, %v98
    %v104 = vunpack.c.l.b16 %v88
    %v105 = vunpack.c.h.b16 %v88
    %v106 = vunpack.c.l.b16 %v89
    %v107 = vunpack.c.h.b16 %v89
    %v108 = vpack.c.b16 %v106, %v104
    %v109 = vpack.c.b16 %v107, %v105
    %vm112 = vcmask 130048
    %v114 = vsel %vm112, %v87, 0
    %116 = vmatprep.subr.bf16.mxu0 0
    %117 = vmatpush1.bf16.msra.mxu0 0
    %118 = vmatprep.subr.bf16.mxu0 0
    %119 = vmatpush1.bf16.msra.mxu0 0
    %120 = vmatprep.subr.bf16.mxu0 0
    %121 = vmatpush1.bf16.msra.mxu0 0
    %122 = vmatprep.subr.bf16.mxu0 0
    %123 = vmatpush1.bf16.msra.mxu0 0
    %124 = vmatprep.subr.bf16.mxu0 0
    %125 = vmatpush1.bf16.msra.mxu0 0
    %126 = vmatprep.subr.bf16.mxu0 0
    %127 = vmatpush1.bf16.msra.mxu0 0
    %128 = vmatprep.subr.bf16.mxu0 0
    %129 = vmatpush1.bf16.msra.mxu0 0
    %130 = vmatprep.subr.bf16.mxu0 %v109
    %131 = vmatpush1.bf16.msra.mxu0 %v108
    %132 = vmatprep.subr.bf16.mxu0 0
    %133 = vmatpush2.bf16.msra.mxu0 0
    %134 = vmatprep.subr.bf16.mxu0 0
    %135 = vmatpush2.bf16.msra.mxu0 0
    %136 = vmatprep.subr.bf16.mxu0 0
    %137 = vmatpush2.bf16.msra.mxu0 0
    %138 = vmatprep.subr.bf16.mxu0 0
    %139 = vmatpush2.bf16.msra.mxu0 0
    %140 = vmatprep.subr.bf16.mxu0 0
    %141 = vmatpush2.bf16.msra.mxu0 0
    %142 = vmatprep.subr.bf16.mxu0 0
    %143 = vmatpush2.bf16.msra.mxu0 0
    %144 = vmatprep.subr.bf16.mxu0 0
    %145 = vmatpush2.bf16.msra.mxu0 0
    %146 = vmatprep.subr.bf16.mxu0 0
    %147 = vmatpush2.bf16.msra.mxu0 0
    %148 = vmatprep.mubr.bf16.mxu0 0
    %149 = vmatmul.mubr.bf16.gmra.mxu0 %v114
    %v150 = vpop.f32.mrf.mxu0
    %v151 = vadd.f32 %v95, %v150
    %v152 = vpop.f32.mrf.mxu0
    %v153 = vadd.f32 %v99, %v152
    %v154 = vpop.f32.mrf.mxu0
    %v155 = vpop.f32.mrf.mxu0
    %156 = vdwg.mxu0
    %v157 = vmax.f32 %v151, 0.0
    %v158 = vmax.f32 %v153, 0.0
    %v159 = vpack.c.bf16 %v157, %v157
    %v160 = vpack.c.bf16 %v158, %v158
    %v161 = vld [vmem:[#allocation8] sm:$0xff]
    %v162 = vld [vmem:[#allocation8 + $0x8] sm:$0xff]
    %v163 = vld [vmem:[#allocation8 + $0x10] sm:$0xff]
    %v164 = vld [vmem:[#allocation8 + $0x18] sm:$0xff]
    %v165 = vld [vmem:[#allocation8 + $0x20] sm:$0xff]
    %v166 = vld [vmem:[#allocation8 + $0x28] sm:$0xff]
    %v167 = vld [vmem:[#allocation8 + $0x30] sm:$0xff]
    %v168 = vld [vmem:[#allocation8 + $0x38] sm:$0xff]
    %v169 = vld [vmem:[#allocation8 + $0x40] sm:$0xff]
    %v170 = vld [vmem:[#allocation8 + $0x48] sm:$0xff]
    %v171 = vld [vmem:[#allocation8 + $0x50] sm:$0xff]
    %v172 = vld [vmem:[#allocation8 + $0x58] sm:$0xff]
    %v173 = vld [vmem:[#allocation8 + $0x60] sm:$0xff]
    %v174 = vld [vmem:[#allocation8 + $0x68] sm:$0xff]
    %v175 = vld [vmem:[#allocation8 + $0x70] sm:$0xff]
    %v176 = vld [vmem:[#allocation8 + $0x78] sm:$0xff]
    %v177 = vld [vmem:[#allocation8 + $0x80] sm:$0xff]
    %v178 = vld [vmem:[#allocation8 + $0x88] sm:$0xff]
    %v179 = vld [vmem:[#allocation8 + $0x90] sm:$0xff]
    %v180 = vld [vmem:[#allocation8 + $0x98] sm:$0xff]
    %v181 = vld [vmem:[#allocation8 + $0xa0] sm:$0xff]
    %v182 = vld [vmem:[#allocation8 + $0xa8] sm:$0xff]
    %v183 = vld [vmem:[#allocation8 + $0xb0] sm:$0xff]
    %v184 = vld [vmem:[#allocation8 + $0xb8] sm:$0xff]
    %v185 = vld [vmem:[#allocation8 + $0xc0] sm:$0xff]
    %v186 = vld [vmem:[#allocation8 + $0xc8] sm:$0xff]
    %v187 = vld [vmem:[#allocation8 + $0xd0] sm:$0xff]
    %v188 = vld [vmem:[#allocation8 + $0xd8] sm:$0xff]
    %v189 = vld [vmem:[#allocation8 + $0xe0] sm:$0xff]
    %v190 = vld [vmem:[#allocation8 + $0xe8] sm:$0xff]
    %v191 = vld [vmem:[#allocation8 + $0xf0] sm:$0xff]
    %v192 = vld [vmem:[#allocation8 + $0xf8] sm:$0xff]
    %v193 = vld [vmem:[%s5] sm:$0x3]
    %v195 = vlaneseq
    %v196 = vshrl.u32 %v195, 7
    %v197 = vsub.s32 0, %v196
    %v198 = vrot.slane %v193, %v197
    %v199 = vlaneseq
    %v200 = vshrl.u32 %v199, 7
    %v201 = vsub.s32 1, %v200
    %v202 = vrot.slane %v193, %v201
    %v237 = vunpack.c.l.b16 %v161
    %v238 = vunpack.c.h.b16 %v161
    %v239 = vunpack.c.l.b16 %v162
    %v240 = vunpack.c.h.b16 %v162
    %v241 = vunpack.c.l.b16 %v163
    %v242 = vunpack.c.h.b16 %v163
    %v243 = vunpack.c.l.b16 %v164
    %v244 = vunpack.c.h.b16 %v164
    %v245 = vunpack.c.l.b16 %v165
    %v246 = vunpack.c.h.b16 %v165
    %v247 = vunpack.c.l.b16 %v166
    %v248 = vunpack.c.h.b16 %v166
    %v249 = vunpack.c.l.b16 %v167
    %v250 = vunpack.c.h.b16 %v167
    %v251 = vunpack.c.l.b16 %v168
    %v252 = vunpack.c.h.b16 %v168
    %v253 = vunpack.c.l.b16 %v169
    %v254 = vunpack.c.h.b16 %v169
    %v255 = vunpack.c.l.b16 %v170
    %v256 = vunpack.c.h.b16 %v170
    %v257 = vunpack.c.l.b16 %v171
    %v258 = vunpack.c.h.b16 %v171
    %v259 = vunpack.c.l.b16 %v172
    %v260 = vunpack.c.h.b16 %v172
    %v261 = vunpack.c.l.b16 %v173
    %v262 = vunpack.c.h.b16 %v173
    %v263 = vunpack.c.l.b16 %v174
    %v264 = vunpack.c.h.b16 %v174
    %v265 = vunpack.c.l.b16 %v175
    %v266 = vunpack.c.h.b16 %v175
    %v267 = vunpack.c.l.b16 %v176
    %v268 = vunpack.c.h.b16 %v176
    %v269 = vunpack.c.l.b16 %v177
    %v270 = vunpack.c.h.b16 %v177
    %v271 = vunpack.c.l.b16 %v178
    %v272 = vunpack.c.h.b16 %v178
    %v273 = vunpack.c.l.b16 %v179
    %v274 = vunpack.c.h.b16 %v179
    %v275 = vunpack.c.l.b16 %v180
    %v276 = vunpack.c.h.b16 %v180
    %v277 = vunpack.c.l.b16 %v181
    %v278 = vunpack.c.h.b16 %v181
    %v279 = vunpack.c.l.b16 %v182
    %v280 = vunpack.c.h.b16 %v182
    %v281 = vunpack.c.l.b16 %v183
    %v282 = vunpack.c.h.b16 %v183
    %v283 = vunpack.c.l.b16 %v184
    %v284 = vunpack.c.h.b16 %v184
    %v285 = vunpack.c.l.b16 %v185
    %v286 = vunpack.c.h.b16 %v185
    %v287 = vunpack.c.l.b16 %v186
    %v288 = vunpack.c.h.b16 %v186
    %v289 = vunpack.c.l.b16 %v187
    %v290 = vunpack.c.h.b16 %v187
    %v291 = vunpack.c.l.b16 %v188
    %v292 = vunpack.c.h.b16 %v188
    %v293 = vunpack.c.l.b16 %v189
    %v294 = vunpack.c.h.b16 %v189
    %v295 = vunpack.c.l.b16 %v190
    %v296 = vunpack.c.h.b16 %v190
    %v297 = vunpack.c.l.b16 %v191
    %v298 = vunpack.c.h.b16 %v191
    %v299 = vunpack.c.l.b16 %v192
    %v300 = vunpack.c.h.b16 %v192
    %v301 = vpack.c.b16 %v239, %v237
    %v302 = vpack.c.b16 %v240, %v238
    %v303 = vpack.c.b16 %v243, %v241
    %v304 = vpack.c.b16 %v244, %v242
    %v305 = vpack.c.b16 %v247, %v245
    %v306 = vpack.c.b16 %v248, %v246
    %v307 = vpack.c.b16 %v251, %v249
    %v308 = vpack.c.b16 %v252, %v250
    %v309 = vpack.c.b16 %v255, %v253
    %v310 = vpack.c.b16 %v256, %v254
    %v311 = vpack.c.b16 %v259, %v257
    %v312 = vpack.c.b16 %v260, %v258
    %v313 = vpack.c.b16 %v263, %v261
    %v314 = vpack.c.b16 %v264, %v262
    %v315 = vpack.c.b16 %v267, %v265
    %v316 = vpack.c.b16 %v268, %v266
    %v317 = vpack.c.b16 %v271, %v269
    %v318 = vpack.c.b16 %v272, %v270
    %v319 = vpack.c.b16 %v275, %v273
    %v320 = vpack.c.b16 %v276, %v274
    %v321 = vpack.c.b16 %v279, %v277
    %v322 = vpack.c.b16 %v280, %v278
    %v323 = vpack.c.b16 %v283, %v281
    %v324 = vpack.c.b16 %v284, %v282
    %v325 = vpack.c.b16 %v287, %v285
    %v326 = vpack.c.b16 %v288, %v286
    %v327 = vpack.c.b16 %v291, %v289
    %v328 = vpack.c.b16 %v292, %v290
    %v329 = vpack.c.b16 %v295, %v293
    %v330 = vpack.c.b16 %v296, %v294
    %v331 = vpack.c.b16 %v299, %v297
    %v332 = vpack.c.b16 %v300, %v298
    %365 = vmatprep.subr.bf16.mxu0 %v316
    %366 = vmatpush1.bf16.msra.mxu0 %v315
    %367 = vmatprep.subr.bf16.mxu0 %v314
    %368 = vmatpush1.bf16.msra.mxu0 %v313
    %369 = vmatprep.subr.bf16.mxu0 %v312
    %370 = vmatpush1.bf16.msra.mxu0 %v311
    %371 = vmatprep.subr.bf16.mxu0 %v310
    %372 = vmatpush1.bf16.msra.mxu0 %v309
    %373 = vmatprep.subr.bf16.mxu0 %v308
    %374 = vmatpush1.bf16.msra.mxu0 %v307
    %375 = vmatprep.subr.bf16.mxu0 %v306
    %376 = vmatpush1.bf16.msra.mxu0 %v305
    %377 = vmatprep.subr.bf16.mxu0 %v304
    %378 = vmatpush1.bf16.msra.mxu0 %v303
    %379 = vmatprep.subr.bf16.mxu0 %v302
    %380 = vmatpush1.bf16.msra.mxu0 %v301
    %381 = vmatprep.subr.bf16.mxu0 %v332
    %382 = vmatpush2.bf16.msra.mxu0 %v331
    %383 = vmatprep.subr.bf16.mxu0 %v330
    %384 = vmatpush2.bf16.msra.mxu0 %v329
    %385 = vmatprep.subr.bf16.mxu0 %v328
    %386 = vmatpush2.bf16.msra.mxu0 %v327
    %387 = vmatprep.subr.bf16.mxu0 %v326
    %388 = vmatpush2.bf16.msra.mxu0 %v325
    %389 = vmatprep.subr.bf16.mxu0 %v324
    %390 = vmatpush2.bf16.msra.mxu0 %v323
    %391 = vmatprep.subr.bf16.mxu0 %v322
    %392 = vmatpush2.bf16.msra.mxu0 %v321
    %393 = vmatprep.subr.bf16.mxu0 %v320
    %394 = vmatpush2.bf16.msra.mxu0 %v319
    %395 = vmatprep.subr.bf16.mxu0 %v318
    %396 = vmatpush2.bf16.msra.mxu0 %v317
    %397 = vmatprep.mubr.bf16.mxu0 %v160
    %398 = vmatmul.mubr.bf16.gmra.mxu0 %v159
    %v399 = vpop.f32.mrf.mxu0
    %v400 = vadd.f32 %v198, %v399
    %v401 = vpop.f32.mrf.mxu0
    %v402 = vadd.f32 %v202, %v401
    %v403 = vpop.f32.mrf.mxu0
    %v404 = vpop.f32.mrf.mxu0
    %405 = vdwg.mxu0
    %v406 = vmax.f32 %v400, 0.0
    %v407 = vmax.f32 %v402, 0.0
    %v408 = vpack.c.bf16 %v406, %v406
    %v409 = vpack.c.bf16 %v407, %v407
    %v410 = vld [vmem:[#allocation9] sm:$0xf]
    %v411 = vld [vmem:[#allocation9 + $0x4] sm:$0xf]
    %v412 = vld [vmem:[#allocation9 + $0x8] sm:$0xf]
    %v413 = vld [vmem:[#allocation9 + $0xc] sm:$0xf]
    %v414 = vld [vmem:[#allocation9 + $0x10] sm:$0xf]
    %v415 = vld [vmem:[#allocation9 + $0x14] sm:$0xf]
    %v416 = vld [vmem:[#allocation9 + $0x18] sm:$0xf]
    %v417 = vld [vmem:[#allocation9 + $0x1c] sm:$0xf]
    %v418 = vld [vmem:[#allocation9 + $0x20] sm:$0xf]
    %v419 = vld [vmem:[#allocation9 + $0x24] sm:$0xf]
    %v420 = vld [vmem:[#allocation9 + $0x28] sm:$0xf]
    %v421 = vld [vmem:[#allocation9 + $0x2c] sm:$0xf]
    %v422 = vld [vmem:[#allocation9 + $0x30] sm:$0xf]
    %v423 = vld [vmem:[#allocation9 + $0x34] sm:$0xf]
    %v424 = vld [vmem:[#allocation9 + $0x38] sm:$0xf]
    %v425 = vld [vmem:[#allocation9 + $0x3c] sm:$0xf]
    %v426 = vld [vmem:[#allocation9 + $0x40] sm:$0xf]
    %v427 = vld [vmem:[#allocation9 + $0x44] sm:$0xf]
    %v428 = vld [vmem:[#allocation9 + $0x48] sm:$0xf]
    %v429 = vld [vmem:[#allocation9 + $0x4c] sm:$0xf]
    %v430 = vld [vmem:[#allocation9 + $0x50] sm:$0xf]
    %v431 = vld [vmem:[#allocation9 + $0x54] sm:$0xf]
    %v432 = vld [vmem:[#allocation9 + $0x58] sm:$0xf]
    %v433 = vld [vmem:[#allocation9 + $0x5c] sm:$0xf]
    %v434 = vld [vmem:[#allocation9 + $0x60] sm:$0xf]
    %v435 = vld [vmem:[#allocation9 + $0x64] sm:$0xf]
    %v436 = vld [vmem:[#allocation9 + $0x68] sm:$0xf]
    %v437 = vld [vmem:[#allocation9 + $0x6c] sm:$0xf]
    %v438 = vld [vmem:[#allocation9 + $0x70] sm:$0xf]
    %v439 = vld [vmem:[#allocation9 + $0x74] sm:$0xf]
    %v440 = vld [vmem:[#allocation9 + $0x78] sm:$0xf]
    %v441 = vld [vmem:[#allocation9 + $0x7c] sm:$0xf]
    %v442 = vld [vmem:[%s7] sm:$0x1]
    %v444 = vlaneseq
    %v445 = vshrl.u32 %v444, 7
    %v446 = vsub.s32 0, %v445
    %v447 = vrot.slane %v442, %v446
    %v481 = vunpack.c.l.b16 %v410
    %v482 = vunpack.c.l.b16 %v411
    %v483 = vunpack.c.l.b16 %v412
    %v484 = vunpack.c.l.b16 %v413
    %v485 = vunpack.c.l.b16 %v414
    %v486 = vunpack.c.l.b16 %v415
    %v487 = vunpack.c.l.b16 %v416
    %v488 = vunpack.c.l.b16 %v417
    %v489 = vunpack.c.l.b16 %v418
    %v490 = vunpack.c.l.b16 %v419
    %v491 = vunpack.c.l.b16 %v420
    %v492 = vunpack.c.l.b16 %v421
    %v493 = vunpack.c.l.b16 %v422
    %v494 = vunpack.c.l.b16 %v423
    %v495 = vunpack.c.l.b16 %v424
    %v496 = vunpack.c.l.b16 %v425
    %v497 = vunpack.c.l.b16 %v426
    %v498 = vunpack.c.l.b16 %v427
    %v499 = vunpack.c.l.b16 %v428
    %v500 = vunpack.c.l.b16 %v429
    %v501 = vunpack.c.l.b16 %v430
    %v502 = vunpack.c.l.b16 %v431
    %v503 = vunpack.c.l.b16 %v432
    %v504 = vunpack.c.l.b16 %v433
    %v505 = vunpack.c.l.b16 %v434
    %v506 = vunpack.c.l.b16 %v435
    %v507 = vunpack.c.l.b16 %v436
    %v508 = vunpack.c.l.b16 %v437
    %v509 = vunpack.c.l.b16 %v438
    %v510 = vunpack.c.l.b16 %v439
    %v511 = vunpack.c.l.b16 %v440
    %v512 = vunpack.c.l.b16 %v441
    %v513 = vpack.c.b16 %v482, %v481
    %v514 = vpack.c.b16 %v484, %v483
    %v515 = vpack.c.b16 %v486, %v485
    %v516 = vpack.c.b16 %v488, %v487
    %v517 = vpack.c.b16 %v490, %v489
    %v518 = vpack.c.b16 %v492, %v491
    %v519 = vpack.c.b16 %v494, %v493
    %v520 = vpack.c.b16 %v496, %v495
    %v521 = vpack.c.b16 %v498, %v497
    %v522 = vpack.c.b16 %v500, %v499
    %v523 = vpack.c.b16 %v502, %v501
    %v524 = vpack.c.b16 %v504, %v503
    %v525 = vpack.c.b16 %v506, %v505
    %v526 = vpack.c.b16 %v508, %v507
    %v527 = vpack.c.b16 %v510, %v509
    %v528 = vpack.c.b16 %v512, %v511
    %545 = vmatprep.subr.bf16.mxu0 0
    %546 = vmatpush1.bf16.msra.mxu0 %v520
    %547 = vmatprep.subr.bf16.mxu0 0
    %548 = vmatpush1.bf16.msra.mxu0 %v519
    %549 = vmatprep.subr.bf16.mxu0 0
    %550 = vmatpush1.bf16.msra.mxu0 %v518
    %551 = vmatprep.subr.bf16.mxu0 0
    %552 = vmatpush1.bf16.msra.mxu0 %v517
    %553 = vmatprep.subr.bf16.mxu0 0
    %554 = vmatpush1.bf16.msra.mxu0 %v516
    %555 = vmatprep.subr.bf16.mxu0 0
    %556 = vmatpush1.bf16.msra.mxu0 %v515
    %557 = vmatprep.subr.bf16.mxu0 0
    %558 = vmatpush1.bf16.msra.mxu0 %v514
    %559 = vmatprep.subr.bf16.mxu0 0
    %560 = vmatpush1.bf16.msra.mxu0 %v513
    %561 = vmatprep.subr.bf16.mxu0 0
    %562 = vmatpush2.bf16.msra.mxu0 %v528
    %563 = vmatprep.subr.bf16.mxu0 0
    %564 = vmatpush2.bf16.msra.mxu0 %v527
    %565 = vmatprep.subr.bf16.mxu0 0
    %566 = vmatpush2.bf16.msra.mxu0 %v526
    %567 = vmatprep.subr.bf16.mxu0 0
    %568 = vmatpush2.bf16.msra.mxu0 %v525
    %569 = vmatprep.subr.bf16.mxu0 0
    %570 = vmatpush2.bf16.msra.mxu0 %v524
    %571 = vmatprep.subr.bf16.mxu0 0
    %572 = vmatpush2.bf16.msra.mxu0 %v523
    %573 = vmatprep.subr.bf16.mxu0 0
    %574 = vmatpush2.bf16.msra.mxu0 %v522
    %575 = vmatprep.subr.bf16.mxu0 0
    %576 = vmatpush2.bf16.msra.mxu0 %v521
    %577 = vmatprep.mubr.bf16.mxu0 %v409
    %578 = vmatmul.mubr.bf16.gmra.mxu0 %v408
    %v579 = vpop.f32.mrf.mxu0
    %v580 = vadd.f32 %v447, %v579
    %v581 = vpop.f32.mrf.mxu0
    %v582 = vpop.f32.mrf.mxu0
    %v583 = vpop.f32.mrf.mxu0
    %584 = vdwg.mxu0
    %v585 = vtanh.pop %v580
    %v586 = vstv %s85
    %v587 = vmul.f32 %v586, %v585
    %588 = vst [vmem:[#allocation11] sm:$0xff] %v587
    // Predicated region
    $region50: #{tpu_custom_call.1} parent=1 // pred_check
      _
    $region51: #{tpu_custom_call.1} parent=1 // pred_check_branch
      %590 = sbr.rel (0) target = $region53
    $region52: #{tpu_custom_call.1} parent=1 // pred_region
      %s592 = ssub.s32 128, 128
      %593 = vsyncadd [#allocation5], %s592
      %s595 = sshll.u32 [#allocation11], 4
      %s596 = int_to_ptr.vmem [resolvable:$true] %s595
      %598 = dma.vmem_to_hbm [thread:$0]  %s596, 128, %s8, [#allocation5]
    $region53: #{tpu_custom_call.1} parent=1 // pred_fallthru
      _
    // Predicated region
    $region54: #{tpu_custom_call.1} parent=1 // pred_check
      _
    $region55: #{tpu_custom_call.1} parent=1 // pred_check_branch
      %600 = sbr.rel (0) target = $region57
    $region56: #{tpu_custom_call.1} parent=1 // pred_region
      %601 = dma.done [#allocation5], 128
    $region57: #{tpu_custom_call.1} parent=1 // pred_fallthru
      _
    %602 = vsyncpa [#allocation4], 1
    %603 = vsyncpa [#allocation7], 1
    %604 = vsyncpa [#allocation10], 1
    %605 = vsyncpa [#allocation5], 1

</llo_original>
